<compile_context>
chip_gen: v6e
topology: v6e:2x2x1
jax: 0.10.0
libtpu: 0.0.40
codegen_flags: <defaults>
</compile_context>

<pallas_src>
import jax
import jax.numpy as jnp
from jax.experimental import pallas as pl
from jax.experimental.pallas import tpu as pltpu

INV_SCALE_FACTOR = 1.06
DROPOUT_P = 0.5

# Signed-int32 threshold so that P(bits_i32 < threshold) == 1 - DROPOUT_P
# for bits_i32 uniform over the full int32 range.
_KEEP_THRESHOLD_I32 = int(round((1.0 - DROPOUT_P) * (1 << 32))) - (1 << 31)


def _attn_dropout_kernel(q_ref, k_ref, v_ref, bits_ref, o_ref):
    # q_ref: (1, TM, D), k_ref: (1, N, D), v_ref: (1, N, E),
    # bits_ref: (1, TM, N), o_ref: (1, TM, E)

    # Fold 1/inv_scale_factor into Q before the first matmul.
    q = (q_ref[0] * jnp.float32(1.0 / INV_SCALE_FACTOR)).astype(jnp.bfloat16)
    k = k_ref[0].astype(jnp.bfloat16)
    v = v_ref[0].astype(jnp.bfloat16)

    # scores = (Q/s) @ K^T as a direct contraction over D (no K transpose copy);
    # bf16 MXU inputs, f32 accumulation.
    scores = jax.lax.dot_general(
        q, k,
        dimension_numbers=(((1,), (1,)), ((), ())),
        preferred_element_type=jnp.float32,
    )  # (TM, N)

    # Numerically stable softmax over the last dim.
    m = jnp.max(scores, axis=-1, keepdims=True)
    e = jnp.exp(scores - m)
    denom = jnp.sum(e, axis=-1, keepdims=True)

    # Fold softmax normalization and dropout survivor scale 1/(1-p) into one (TM, 1) factor.
    inv = jnp.float32(1.0 / (1.0 - DROPOUT_P)) / denom

    # Dropout: single signed-int compare + select on the (TM, N) tile.
    keep = bits_ref[0] < jnp.int32(_KEEP_THRESHOLD_I32)
    probs = jnp.where(keep, e * inv, 0.0)

    # output = dropout(softmax(scores)) @ V, bf16 MXU inputs, f32 accumulation.
    out = jnp.dot(probs.astype(jnp.bfloat16), v, preferred_element_type=jnp.float32)
    o_ref[0] = out.astype(o_ref.dtype)


def attention_dropout(query, key, value, x1, *, seed=0, tm=None):
    """softmax(Q @ K^T / inv_scale) -> dropout(p=0.5, training) -> @ V.

    x1 is accepted for signature parity with the PyTorch module but unused."""
    del x1
    B, M, D = query.shape
    Bk, N, Dk = key.shape
    Bv, Nv, E = value.shape
    assert B == Bk == Bv and D == Dk and N == Nv

    if tm is None:
        for cand in (256, 128, 64, 32, 16, 8):
            if M % cand == 0:
                tm = cand
                break
        else:
            tm = M
    assert M % tm == 0
    m_blocks = M // tm

    # Precomputed dropout bits per (batch, row, col) — mask is tiling-independent.
    bits_u32 = jax.random.bits(jax.random.PRNGKey(seed), (B, M, N), dtype=jnp.uint32)
    bits = jax.lax.bitcast_convert_type(bits_u32, jnp.int32)

    itemsize = query.dtype.itemsize
    cost = pl.CostEstimate(
        flops=2 * B * M * N * (D + E),
        transcendentals=B * M * N,
        bytes_accessed=(query.size + key.size + value.size + B * M * E) * itemsize
        + bits.size * 4,
    )

    return pl.pallas_call(
        _attn_dropout_kernel,
        out_shape=jax.ShapeDtypeStruct((B, M, E), query.dtype),
        grid=(B, m_blocks),
        in_specs=[
            pl.BlockSpec((1, tm, D), lambda b, i: (b, i, 0)),
            pl.BlockSpec((1, N, D), lambda b, i: (b, 0, 0)),
            pl.BlockSpec((1, N, E), lambda b, i: (b, 0, 0)),
            pl.BlockSpec((1, tm, N), lambda b, i: (b, i, 0)),
        ],
        out_specs=pl.BlockSpec((1, tm, E), lambda b, i: (b, i, 0)),
        compiler_params=pltpu.CompilerParams(
            dimension_semantics=("parallel", "parallel"),
        ),
        cost_estimate=cost,
    )(query, key, value, bits)


if __name__ == "__main__":
    # Small shapes consistent with the module's forward:
    #   query (B, M, D), key (B, N, D), value (B, N, E) -> output (B, M, E)
    B, M, N, D, E = 2, 256, 256, 128, 128
    seed = 1234

    rng = jax.random.PRNGKey(0)
    kq, kk, kv, kx = jax.random.split(rng, 4)
    query = jax.random.normal(kq, (B, M, D), dtype=jnp.float32)
    key = jax.random.normal(kk, (B, N, D), dtype=jnp.float32)
    value = jax.random.normal(kv, (B, N, E), dtype=jnp.float32)
    x1 = jax.random.normal(kx, (B, M, D), dtype=jnp.float32)  # unused by forward

    out = attention_dropout(query, key, value, x1, seed=seed, tm=128)
    out = jax.block_until_ready(out)
    assert out.shape == (B, M, E)
    assert bool(jnp.all(jnp.isfinite(out)))

    # Pure-JAX reference using the same dropout mask and same bf16-matmul precision.
    bits_u32 = jax.random.bits(jax.random.PRNGKey(seed), (B, M, N), dtype=jnp.uint32)
    bits = jax.lax.bitcast_convert_type(bits_u32, jnp.int32)
    qs = (query * (1.0 / INV_SCALE_FACTOR)).astype(jnp.bfloat16)
    scores = jnp.einsum("bmd,bnd->bmn", qs, key.astype(jnp.bfloat16),
                        preferred_element_type=jnp.float32)
    mx = jnp.max(scores, axis=-1, keepdims=True)
    e = jnp.exp(scores - mx)
    denom = jnp.sum(e, axis=-1, keepdims=True)
    probs = jnp.where(bits < _KEEP_THRESHOLD_I32,
                      e * ((1.0 / (1.0 - DROPOUT_P)) / denom), 0.0)
    ref = jnp.einsum("bmn,bne->bme", probs.astype(jnp.bfloat16),
                     value.astype(jnp.bfloat16),
                     preferred_element_type=jnp.float32).astype(out.dtype)
    assert bool(jnp.allclose(out, ref, atol=5e-2, rtol=5e-2))

    print("KERNEL_OK")
</pallas_src>

<mosaic_0001>
module attributes {stable_mosaic.version = 11 : i64} {
  func.func @_attn_dropout_kernel(%arg0: i32, %arg1: i32, %arg2: memref<1x128x128xf32, #tpu.memory_space<vmem>>, %arg3: memref<1x256x128xf32, #tpu.memory_space<vmem>>, %arg4: memref<1x256x128xf32, #tpu.memory_space<vmem>>, %arg5: memref<1x128x256xi32, #tpu.memory_space<vmem>>, %arg6: memref<1x128x128xf32, #tpu.memory_space<vmem>>) attributes {dimension_semantics = [#tpu.dimension_semantics<parallel>, #tpu.dimension_semantics<parallel>], iteration_bounds = array<i64: 2, 2>, scalar_prefetch = 0 : i64, scratch_operands = 0 : i64, tpu.core_type = #tpu.core_type<tc>, window_params = [{transform_indices = @transform_0, window_bounds = array<i64: 1, 128, 128>}, {transform_indices = @transform_1, window_bounds = array<i64: 1, 256, 128>}, {transform_indices = @transform_2, window_bounds = array<i64: 1, 256, 128>}, {transform_indices = @transform_3, window_bounds = array<i64: 1, 128, 256>}, {transform_indices = @transform_4, window_bounds = array<i64: 1, 128, 128>}]} {
    %c0 = arith.constant 0 : index
    %c0_0 = arith.constant 0 : index
    %c0_1 = arith.constant 0 : index
    %0 = vector.load %arg2[%c0, %c0_0, %c0_1] : memref<1x128x128xf32, #tpu.memory_space<vmem>>, vector<1x128x128xf32>
    %1 = vector.shape_cast %0 : vector<1x128x128xf32> to vector<128x128xf32>
    %cst = arith.constant 0.94339621 : f32
    %2 = vector.broadcast %cst : f32 to vector<128x128xf32>
    %3 = arith.mulf %1, %2 : vector<128x128xf32>
    %4 = arith.truncf %3 : vector<128x128xf32> to vector<128x128xbf16>
    %c0_2 = arith.constant 0 : index
    %c0_3 = arith.constant 0 : index
    %c0_4 = arith.constant 0 : index
    %5 = vector.load %arg3[%c0_2, %c0_3, %c0_4] : memref<1x256x128xf32, #tpu.memory_space<vmem>>, vector<1x256x128xf32>
    %6 = vector.shape_cast %5 : vector<1x256x128xf32> to vector<256x128xf32>
    %7 = arith.truncf %6 : vector<256x128xf32> to vector<256x128xbf16>
    %c0_5 = arith.constant 0 : index
    %c0_6 = arith.constant 0 : index
    %c0_7 = arith.constant 0 : index
    %8 = vector.load %arg4[%c0_5, %c0_6, %c0_7] : memref<1x256x128xf32, #tpu.memory_space<vmem>>, vector<1x256x128xf32>
    %9 = vector.shape_cast %8 : vector<1x256x128xf32> to vector<256x128xf32>
    %10 = arith.truncf %9 : vector<256x128xf32> to vector<256x128xbf16>
    %cst_8 = arith.constant dense<0.000000e+00> : vector<128x256xf32>
    %11 = tpu.matmul %4, %7, %cst_8 {dimension_numbers = #tpu.dot_dimension_numbers<[1], [1], [0], [0], [0, 0, 1, 0], [], []>} : vector<128x128xbf16>, vector<256x128xbf16>, vector<128x256xf32> -> vector<128x256xf32>
    %cst_9 = arith.constant dense<0xFF800000> : vector<128xf32>
    %12 = vector.multi_reduction <maximumf>, %11, %cst_9 [1] : vector<128x256xf32> to vector<128xf32>
    %13 = vector.shape_cast %12 : vector<128xf32> to vector<128x1xf32>
    %14 = vector.broadcast %13 : vector<128x1xf32> to vector<128x256xf32>
    %15 = arith.subf %11, %14 : vector<128x256xf32>
    %16 = math.exp %15 : vector<128x256xf32>
    %cst_10 = arith.constant dense<0.000000e+00> : vector<128xf32>
    %17 = vector.multi_reduction <add>, %16, %cst_10 [1] : vector<128x256xf32> to vector<128xf32>
    %18 = vector.shape_cast %17 : vector<128xf32> to vector<128x1xf32>
    %cst_11 = arith.constant 2.000000e+00 : f32
    %19 = vector.broadcast %cst_11 : f32 to vector<128x1xf32>
    %20 = arith.divf %19, %18 : vector<128x1xf32>
    %c0_12 = arith.constant 0 : index
    %c0_13 = arith.constant 0 : index
    %c0_14 = arith.constant 0 : index
    %21 = vector.load %arg5[%c0_12, %c0_13, %c0_14] : memref<1x128x256xi32, #tpu.memory_space<vmem>>, vector<1x128x256xi32>
    %22 = vector.shape_cast %21 : vector<1x128x256xi32> to vector<128x256xi32>
    %c0_i32 = arith.constant 0 : i32
    %23 = vector.broadcast %c0_i32 : i32 to vector<128x256xi32>
    %24 = arith.cmpi slt, %22, %23 : vector<128x256xi32>
    %25 = vector.broadcast %20 : vector<128x1xf32> to vector<128x256xf32>
    %26 = arith.mulf %16, %25 : vector<128x256xf32>
    %cst_15 = arith.constant 0.000000e+00 : f32
    %27 = vector.broadcast %cst_15 : f32 to vector<128x256xf32>
    %28 = arith.select %24, %26, %27 : vector<128x256xi1>, vector<128x256xf32>
    %29 = arith.truncf %28 : vector<128x256xf32> to vector<128x256xbf16>
    %cst_16 = arith.constant dense<0.000000e+00> : vector<128x128xf32>
    %30 = tpu.matmul %29, %10, %cst_16 {dimension_numbers = #tpu.dot_dimension_numbers<[1], [0], [0], [1], [0, 0, 1, 1], [], []>} : vector<128x256xbf16>, vector<256x128xbf16>, vector<128x128xf32> -> vector<128x128xf32>
    %c0_17 = arith.constant 0 : index
    %c0_18 = arith.constant 0 : index
    %c0_19 = arith.constant 0 : index
    %31 = vector.load %arg6[%c0_17, %c0_18, %c0_19] : memref<1x128x128xf32, #tpu.memory_space<vmem>>, vector<1x128x128xf32>
    %32 = vector.shape_cast %31 : vector<1x128x128xf32> to vector<128x128xf32>
    %33 = vector.shape_cast %30 : vector<128x128xf32> to vector<1x128x128xf32>
    tpu.vector_store %arg6[%c0_17, %c0_18, %c0_19], %33 {strides = array<i32>} : memref<1x128x128xf32, #tpu.memory_space<vmem>>, vector<1x128x128xf32>,
    return
  }
  func.func @transform_0(%arg0: i32, %arg1: i32) -> (i32, i32, i32) {
    %c0_i32 = arith.constant 0 : i32
    %c0_i32_0 = arith.constant 0 : i32
    return %arg0, %arg1, %c0_i32 : i32, i32, i32
  }
  func.func @transform_1(%arg0: i32, %arg1: i32) -> (i32, i32, i32) {
    %c0_i32 = arith.constant 0 : i32
    %c0_i32_0 = arith.constant 0 : i32
    %c0_i32_1 = arith.constant 0 : i32
    return %arg0, %c0_i32, %c0_i32_0 : i32, i32, i32
  }
  func.func @transform_2(%arg0: i32, %arg1: i32) -> (i32, i32, i32) {
    %c0_i32 = arith.constant 0 : i32
    %c0_i32_0 = arith.constant 0 : i32
    %c0_i32_1 = arith.constant 0 : i32
    return %arg0, %c0_i32, %c0_i32_0 : i32, i32, i32
  }
  func.func @transform_3(%arg0: i32, %arg1: i32) -> (i32, i32, i32) {
    %c0_i32 = arith.constant 0 : i32
    %c0_i32_0 = arith.constant 0 : i32
    return %arg0, %arg1, %c0_i32 : i32, i32, i32
  }
  func.func @transform_4(%arg0: i32, %arg1: i32) -> (i32, i32, i32) {
    %c0_i32 = arith.constant 0 : i32
    %c0_i32_0 = arith.constant 0 : i32
    return %arg0, %arg1, %c0_i32 : i32, i32, i32
  }
}

</mosaic_0001>

<llo_original>
// kernel: tpu_custom_call.1
$region0: #{tpu_custom_call.1}
  #allocation0 [shape = 'u32[]', space=smem, size = 0x4, offset = 0x4, fixed_abs, tag = 'smem constant byte address 0x4 - core index']
  #allocation1 [shape = 'u32[144,128]{1,0:T(1,128)}', space=vmem, size = 0x12000, scoped, tag = 'internal scratch']
  %s0 = inlined_call_operand.hbm [shape: f32[2,256,128], index: 0, kind: input, shape index: {}]
  %s1 = inlined_call_operand.hbm [shape: f32[2,256,128], index: 1, kind: input, shape index: {}]
  %s2 = inlined_call_operand.hbm [shape: f32[2,256,128], index: 2, kind: input, shape index: {}]
  %s3 = inlined_call_operand.hbm [shape: s32[2,256,256], index: 3, kind: input, shape index: {}]
  %s4 = inlined_call_operand.hbm [shape: f32[2,256,128], index: 4, kind: output, shape index: {}]
  %s5 = sld [smem:[#allocation0]]
  $region65: #{tpu_custom_call.1} parent=0
    _
  %s7 = ssub.s32 1, %s5
  %s8 = scalar_select 0, %s7, %s5
  $region1: #{tpu_custom_call.1} parent=0
    #allocation2 [shape = 'u8[131072]{0}', space=vmem, size = 0x20000, scoped, tag = 'input window, operand 0']
    #allocation3 [shape = 's32[2]{0}', space=sflag, size = 0x8, scoped, tag = 'scoped memory for tpu_custom_call.1']
    #allocation4 [shape = 's32[2]{0}', space=sflag, size = 0x8, scoped, tag = 'scoped memory for tpu_custom_call.1']
    #allocation5 [shape = 'u8[262144]{0}', space=vmem, size = 0x40000, scoped, tag = 'input window, operand 1']
    #allocation6 [shape = 's32[2]{0}', space=sflag, size = 0x8, scoped, tag = 'scoped memory for tpu_custom_call.1']
    #allocation7 [shape = 'u8[262144]{0}', space=vmem, size = 0x40000, scoped, tag = 'input window, operand 2']
    #allocation8 [shape = 'u8[262144]{0}', space=vmem, size = 0x40000, scoped, tag = 'input window, operand 3']
    #allocation9 [shape = 's32[2]{0}', space=sflag, size = 0x8, scoped, tag = 'scoped memory for tpu_custom_call.1']
    #allocation10 [shape = 'u8[131072]{0}', space=vmem, size = 0x20000, scoped, tag = 'output window, operand 0']
    %9 = vsyncpa [#allocation3], 0
    %s10 = scalar_lea.sflag [#allocation3], 1
    %11 = vsyncpa %s10, 0
    %12 = vsyncpa [#allocation6], 0
    %s13 = scalar_lea.sflag [#allocation6], 1
    %14 = vsyncpa %s13, 0
    %15 = vsyncpa [#allocation9], 0
    %s16 = scalar_lea.sflag [#allocation9], 1
    %17 = vsyncpa %s16, 0
    %18 = vsyncpa [#allocation4], 0
    %s19 = scalar_lea.sflag [#allocation4], 1
    %20 = vsyncpa %s19, 0
    loop: start=0, step=1, limit=6
    $region2: #{tpu_custom_call.1} parent=1 // loop_pre_header
      _
    $region3: #{tpu_custom_call.1} parent=1 // loop_header
      %s22 = sphi 0, %s26
      %p23 = scmp.ge.s32.totalorder %s22, 6
      %s29 = sphi 0, %s41
      %s30 = sphi 0, %s37
      %s31 = sphi 0, %s29
      %s32 = sphi 0, %s30
      %s33 = sphi 0, %s31
      %s34 = sphi 0, %s32
      %s46 = sphi 0, %s48
      %s49 = sphi 0, %s46
      %s50 = sphi 0, %s49
      %s66 = sphi 0, %s50
      %s72 = sphi 0, %s74
      %s75 = sphi 0, %s72
      %s76 = sphi 0, %s75
      %s92 = sphi 0, %s76
      %s98 = sphi 0, %s100
      %s101 = sphi 0, %s98
      %s102 = sphi 0, %s101
      %s118 = sphi 0, %s102
      %s126 = sphi 0, %s128
      %s129 = sphi 0, %s126
      %s130 = sphi 0, %s129
      %s146 = sphi 0, %s130
      %s154 = sphi 0, %s156
      %s157 = sphi 0, %s154
      %s158 = sphi 0, %s157
      %s174 = sphi 0, %s158
    $region4: #{tpu_custom_call.1} parent=1 // loop_header_branch
      %25 = sbr.rel (%p23) target = $region8
    $region5: #{tpu_custom_call.1} parent=1 // loop_body
      %s27 = ssub.s32 %s22, 1
      %s28 = ssub.s32 %s22, 2
      %s35 = sadd.s32 1, %s30
      %p36 = scmp.ge.s32.totalorder %s35, 2
      %s37 = scalar_select %p36, 0, %s35
      %s38 = sadd.s32 1, %s29
      %s39 = scalar_select %p36, %s38, %s29
      %p40 = scmp.ge.s32.totalorder %s39, 2
      %s41 = scalar_select %p40, 0, %s39
      %s42 = ssub.s32 %s29, %s41
      %s43 = ssub.s32 %s30, %s37
      %s44 = sor.u32 %s42, %s43
      %p45 = scmp.eq.s32.totalorder %s44, 0
      %s47 = sadd.s32 %s46, 1
      %s48 = scalar_select %p45, %s46, %s47
      %p51 = pneg %p45
      %p52 = scmp.eq.s32.totalorder %s22, 3
      %p53 = por %p51, %p52
      %p54 = scmp.ne.s32.totalorder %s46, %s49
      %p55 = scmp.eq.s32.totalorder %s22, 0
      %p56 = por %p54, %p55
      %p57 = scmp.ne.s32.totalorder %s46, %s49
      %p58 = scmp.eq.s32.totalorder %s27, 3
      %p59 = por %p57, %p58
      %p60 = scmp.ne.s32.totalorder %s49, %s50
      %p61 = scmp.eq.s32.totalorder %s27, 0
      %p62 = por %p60, %p61
      %p63 = scmp.ne.s32.totalorder %s49, %s50
      %p64 = scmp.eq.s32.totalorder %s28, 3
      %p65 = por %p63, %p64
      %p67 = scmp.ne.s32.totalorder %s50, %s66
      %p68 = scmp.eq.s32.totalorder %s28, 0
      %p69 = por %p67, %p68
      %s70 = ssub.s32 %s29, %s41
      %p71 = scmp.eq.s32.totalorder %s70, 0
      %s73 = sadd.s32 %s72, 1
      %s74 = scalar_select %p71, %s72, %s73
      %p77 = pneg %p71
      %p78 = scmp.eq.s32.totalorder %s22, 3
      %p79 = por %p77, %p78
      %p80 = scmp.ne.s32.totalorder %s72, %s75
      %p81 = scmp.eq.s32.totalorder %s22, 0
      %p82 = por %p80, %p81
      %p83 = scmp.ne.s32.totalorder %s72, %s75
      %p84 = scmp.eq.s32.totalorder %s27, 3
      %p85 = por %p83, %p84
      %p86 = scmp.ne.s32.totalorder %s75, %s76
      %p87 = scmp.eq.s32.totalorder %s27, 0
      %p88 = por %p86, %p87
      %p89 = scmp.ne.s32.totalorder %s75, %s76
      %p90 = scmp.eq.s32.totalorder %s28, 3
      %p91 = por %p89, %p90
      %p93 = scmp.ne.s32.totalorder %s76, %s92
      %p94 = scmp.eq.s32.totalorder %s28, 0
      %p95 = por %p93, %p94
      %s96 = ssub.s32 %s29, %s41
      %p97 = scmp.eq.s32.totalorder %s96, 0
      %s99 = sadd.s32 %s98, 1
      %s100 = scalar_select %p97, %s98, %s99
      %p103 = pneg %p97
      %p104 = scmp.eq.s32.totalorder %s22, 3
      %p105 = por %p103, %p104
      %p106 = scmp.ne.s32.totalorder %s98, %s101
      %p107 = scmp.eq.s32.totalorder %s22, 0
      %p108 = por %p106, %p107
      %p109 = scmp.ne.s32.totalorder %s98, %s101
      %p110 = scmp.eq.s32.totalorder %s27, 3
      %p111 = por %p109, %p110
      %p112 = scmp.ne.s32.totalorder %s101, %s102
      %p113 = scmp.eq.s32.totalorder %s27, 0
      %p114 = por %p112, %p113
      %p115 = scmp.ne.s32.totalorder %s101, %s102
      %p116 = scmp.eq.s32.totalorder %s28, 3
      %p117 = por %p115, %p116
      %p119 = scmp.ne.s32.totalorder %s102, %s118
      %p120 = scmp.eq.s32.totalorder %s28, 0
      %p121 = por %p119, %p120
      %s122 = ssub.s32 %s29, %s41
      %s123 = ssub.s32 %s30, %s37
      %s124 = sor.u32 %s122, %s123
      %p125 = scmp.eq.s32.totalorder %s124, 0
      %s127 = sadd.s32 %s126, 1
      %s128 = scalar_select %p125, %s126, %s127
      %p131 = pneg %p125
      %p132 = scmp.eq.s32.totalorder %s22, 3
      %p133 = por %p131, %p132
      %p134 = scmp.ne.s32.totalorder %s126, %s129
      %p135 = scmp.eq.s32.totalorder %s22, 0
      %p136 = por %p134, %p135
      %p137 = scmp.ne.s32.totalorder %s126, %s129
      %p138 = scmp.eq.s32.totalorder %s27, 3
      %p139 = por %p137, %p138
      %p140 = scmp.ne.s32.totalorder %s129, %s130
      %p141 = scmp.eq.s32.totalorder %s27, 0
      %p142 = por %p140, %p141
      %p143 = scmp.ne.s32.totalorder %s129, %s130
      %p144 = scmp.eq.s32.totalorder %s28, 3
      %p145 = por %p143, %p144
      %p147 = scmp.ne.s32.totalorder %s130, %s146
      %p148 = scmp.eq.s32.totalorder %s28, 0
      %p149 = por %p147, %p148
      %s150 = ssub.s32 %s29, %s41
      %s151 = ssub.s32 %s30, %s37
      %s152 = sor.u32 %s150, %s151
      %p153 = scmp.eq.s32.totalorder %s152, 0
      %s155 = sadd.s32 %s154, 1
      %s156 = scalar_select %p153, %s154, %s155
      %p159 = pneg %p153
      %p160 = scmp.eq.s32.totalorder %s22, 3
      %p161 = por %p159, %p160
      %p162 = scmp.ne.s32.totalorder %s154, %s157
      %p163 = scmp.eq.s32.totalorder %s22, 0
      %p164 = por %p162, %p163
      %p165 = scmp.ne.s32.totalorder %s154, %s157
      %p166 = scmp.eq.s32.totalorder %s27, 3
      %p167 = por %p165, %p166
      %p168 = scmp.ne.s32.totalorder %s157, %s158
      %p169 = scmp.eq.s32.totalorder %s27, 0
      %p170 = por %p168, %p169
      %p171 = scmp.ne.s32.totalorder %s157, %s158
      %p172 = scmp.eq.s32.totalorder %s28, 3
      %p173 = por %p171, %p172
      %p175 = scmp.ne.s32.totalorder %s158, %s174
      %p176 = scmp.eq.s32.totalorder %s28, 0
      %p177 = por %p175, %p176
      %p178 = scmp.le.s32.totalorder 1, %s22
      %p179 = scmp.lt.s32.totalorder %s22, 5
      %p180 = pnand %p178, %p179
      %p181 = pneg %p180
      // Predicated region
      $region9: #{tpu_custom_call.1} parent=5 // pred_check
        _
      $region10: #{tpu_custom_call.1} parent=5 // pred_check_branch
        %183 = sbr.rel (%p180) target = $region12
      $region11: #{tpu_custom_call.1} parent=5 // pred_region
        %s184 = ssub.s32 %s22, 1
      $region12: #{tpu_custom_call.1} parent=5 // pred_fallthru
        _
      %p185 = scmp.lt.s32.totalorder %s22, 4
      // Predicated region
      $region13: #{tpu_custom_call.1} parent=5 // pred_check
        %p186 = pneg %p185
      $region14: #{tpu_custom_call.1} parent=5 // pred_check_branch
        %188 = sbr.rel (%p186) target = $region16
      $region15: #{tpu_custom_call.1} parent=5 // pred_region
        // Predicated region
        $region17: #{tpu_custom_call.1} parent=15 // pred_check
          %p189 = pneg %p56
        $region18: #{tpu_custom_call.1} parent=15 // pred_check_branch
          %191 = sbr.rel (%p189) target = $region20
        $region19: #{tpu_custom_call.1} parent=15 // pred_region
          %s192 = sand.u32 %s46, 1
          %s193 = scalar_lea.sflag [#allocation3], %s192
          %s194 = sand.u32 %s46, 1
          %s195 = smul.addr %s194, 128
          %s196 = scalar_lea.vmem [#allocation2], %s195
          %s197 = smul.u32 16, %s30
          %s199 = ssub.s32 2048, 2048
          %200 = vsyncadd %s193, %s199
          %s201 = smul.addr %s29, 32
          %s202 = sadd.s32 %s197, %s201
          %s203 = smul.addr %s202, 128
          %s204 = scalar_lea.hbm %s0, %s203
          %s205 = sshll.u32 %s196, 4
          %s206 = int_to_ptr.vmem [resolvable:$true] %s205
          %211 = dma.hbm_to_vmem [thread:$0]  %s204, 2048, %s206, %s193, 128, 128, 8
        $region20: #{tpu_custom_call.1} parent=15 // pred_fallthru
          _
        // Predicated region
        $region21: #{tpu_custom_call.1} parent=15 // pred_check
          %p212 = pneg %p82
        $region22: #{tpu_custom_call.1} parent=15 // pred_check_branch
          %214 = sbr.rel (%p212) target = $region24
        $region23: #{tpu_custom_call.1} parent=15 // pred_region
          %s215 = sand.u32 %s22, 1
          %s216 = scalar_lea.sflag [#allocation6], %s215
          %s217 = sand.u32 %s72, 1
          %s218 = smul.addr %s217, 256
          %s219 = scalar_lea.vmem [#allocation5], %s218
          %s221 = ssub.s32 4096, 4096
          %222 = vsyncadd %s216, %s221
          %s223 = smul.addr %s29, 32
          %s224 = smul.addr %s223, 128
          %s225 = scalar_lea.hbm %s1, %s224
          %s226 = sshll.u32 %s219, 4
          %s227 = int_to_ptr.vmem [resolvable:$true] %s226
          %232 = dma.hbm_to_vmem [thread:$0]  %s225, 4096, %s227, %s216, 128, 128, 8
        $region24: #{tpu_custom_call.1} parent=15 // pred_fallthru
          _
        // Predicated region
        $region25: #{tpu_custom_call.1} parent=15 // pred_check
          %p233 = pneg %p108
        $region26: #{tpu_custom_call.1} parent=15 // pred_check_branch
          %235 = sbr.rel (%p233) target = $region28
        $region27: #{tpu_custom_call.1} parent=15 // pred_region
          %s236 = sand.u32 %s22, 1
          %s237 = scalar_lea.sflag [#allocation6], %s236
          %s238 = sand.u32 %s98, 1
          %s239 = smul.addr %s238, 256
          %s240 = scalar_lea.vmem [#allocation7], %s239
          %s242 = ssub.s32 4096, 4096
          %243 = vsyncadd %s237, %s242
          %s244 = smul.addr %s29, 32
          %s245 = smul.addr %s244, 128
          %s246 = scalar_lea.hbm %s2, %s245
          %s247 = sshll.u32 %s240, 4
          %s248 = int_to_ptr.vmem [resolvable:$true] %s247
          %253 = dma.hbm_to_vmem [thread:$0]  %s246, 4096, %s248, %s237, 128, 128, 8
        $region28: #{tpu_custom_call.1} parent=15 // pred_fallthru
          _
        // Predicated region
        $region29: #{tpu_custom_call.1} parent=15 // pred_check
          %p254 = pneg %p136
        $region30: #{tpu_custom_call.1} parent=15 // pred_check_branch
          %256 = sbr.rel (%p254) target = $region32
        $region31: #{tpu_custom_call.1} parent=15 // pred_region
          %s257 = sand.u32 %s126, 1
          %s258 = scalar_lea.sflag [#allocation9], %s257
          %s259 = sand.u32 %s126, 1
          %s260 = smul.addr %s259, 256
          %s261 = scalar_lea.vmem [#allocation8], %s260
          %s262 = smul.u32 16, %s30
          %s264 = ssub.s32 4096, 4096
          %265 = vsyncadd %s258, %s264
          %s266 = smul.addr %s262, 2
          %s267 = smul.addr %s29, 64
          %s268 = sadd.s32 %s266, %s267
          %s269 = smul.addr %s268, 128
          %s270 = scalar_lea.hbm %s3, %s269
          %s271 = sshll.u32 %s261, 4
          %s272 = int_to_ptr.vmem [resolvable:$true] %s271
          %277 = dma.hbm_to_vmem [thread:$0]  %s270, 4096, %s272, %s258, 256, 256, 16
        $region32: #{tpu_custom_call.1} parent=15 // pred_fallthru
          _
      $region16: #{tpu_custom_call.1} parent=5 // pred_fallthru
        _
      %p278 = scmp.le.s32.totalorder 1, %s22
      %p279 = scmp.lt.s32.totalorder %s22, 5
      %p280 = pnand %p278, %p279
      %p281 = pneg %p280
      // Predicated region
      $region33: #{tpu_custom_call.1} parent=5 // pred_check
        _
      $region34: #{tpu_custom_call.1} parent=5 // pred_check_branch
        %283 = sbr.rel (%p280) target = $region36
      $region35: #{tpu_custom_call.1} parent=5 // pred_region
        %s284 = ssub.s32 %s22, 1
        %s285 = sand.u32 %s49, 1
        %s286 = scalar_lea.sflag [#allocation3], %s285
        %s287 = sand.u32 %s49, 1
        %s288 = smul.addr %s287, 128
        %s289 = scalar_lea.vmem [#allocation2], %s288
        // Predicated region
        $region37: #{tpu_custom_call.1} parent=35 // pred_check
          %p290 = pneg %p62
        $region38: #{tpu_custom_call.1} parent=35 // pred_check_branch
          %292 = sbr.rel (%p290) target = $region40
        $region39: #{tpu_custom_call.1} parent=35 // pred_region
          %293 = dma.done %s286, 2048
        $region40: #{tpu_custom_call.1} parent=35 // pred_fallthru
          _
        %s294 = sand.u32 %s27, 1
        %s295 = scalar_lea.sflag [#allocation6], %s294
        %s296 = sand.u32 %s75, 1
        %s297 = smul.addr %s296, 256
        %s298 = scalar_lea.vmem [#allocation5], %s297
        // Predicated region
        $region41: #{tpu_custom_call.1} parent=35 // pred_check
          %p299 = pneg %p88
        $region42: #{tpu_custom_call.1} parent=35 // pred_check_branch
          %301 = sbr.rel (%p299) target = $region44
        $region43: #{tpu_custom_call.1} parent=35 // pred_region
          %302 = dma.done %s295, 4096
        $region44: #{tpu_custom_call.1} parent=35 // pred_fallthru
          _
        %s303 = sand.u32 %s27, 1
        %s304 = scalar_lea.sflag [#allocation6], %s303
        %s305 = sand.u32 %s101, 1
        %s306 = smul.addr %s305, 256
        %s307 = scalar_lea.vmem [#allocation7], %s306
        // Predicated region
        $region45: #{tpu_custom_call.1} parent=35 // pred_check
          %p308 = pneg %p114
        $region46: #{tpu_custom_call.1} parent=35 // pred_check_branch
          %310 = sbr.rel (%p308) target = $region48
        $region47: #{tpu_custom_call.1} parent=35 // pred_region
          %311 = dma.done %s304, 4096
        $region48: #{tpu_custom_call.1} parent=35 // pred_fallthru
          _
        %s312 = sand.u32 %s129, 1
        %s313 = scalar_lea.sflag [#allocation9], %s312
        %s314 = sand.u32 %s129, 1
        %s315 = smul.addr %s314, 256
        %s316 = scalar_lea.vmem [#allocation8], %s315
        // Predicated region
        $region49: #{tpu_custom_call.1} parent=35 // pred_check
          %p317 = pneg %p142
        $region50: #{tpu_custom_call.1} parent=35 // pred_check_branch
          %319 = sbr.rel (%p317) target = $region52
        $region51: #{tpu_custom_call.1} parent=35 // pred_region
          %320 = dma.done %s313, 4096
        $region52: #{tpu_custom_call.1} parent=35 // pred_fallthru
          _
        %s321 = sand.u32 %s49, 1
        %s322 = scalar_lea.sflag [#allocation3], %s321
        %s323 = sand.u32 %s49, 1
        %s324 = smul.addr %s323, 128
        %s325 = scalar_lea.vmem [#allocation2], %s324
        %p326 = pneg %p62
        %p327 = pneg %p59
        %s328 = sand.u32 %s27, 1
        %s329 = scalar_lea.sflag [#allocation6], %s328
        %s330 = sand.u32 %s75, 1
        %s331 = smul.addr %s330, 256
        %s332 = scalar_lea.vmem [#allocation5], %s331
        %p333 = pneg %p88
        %p334 = pneg %p85
        %s335 = sand.u32 %s27, 1
        %s336 = scalar_lea.sflag [#allocation6], %s335
        %s337 = sand.u32 %s101, 1
        %s338 = smul.addr %s337, 256
        %s339 = scalar_lea.vmem [#allocation7], %s338
        %p340 = pneg %p114
        %p341 = pneg %p111
        %s342 = sand.u32 %s129, 1
        %s343 = scalar_lea.sflag [#allocation9], %s342
        %s344 = sand.u32 %s129, 1
        %s345 = smul.addr %s344, 256
        %s346 = scalar_lea.vmem [#allocation8], %s345
        %p347 = pneg %p142
        %p348 = pneg %p139
        %p349 = pneg %p170
        %p350 = pneg %p167
        %s351 = sand.u32 %s157, 1
        %s352 = scalar_lea.sflag [#allocation4], %s351
        %s353 = sand.u32 %s157, 1
        %s354 = smul.addr %s353, 128
        %s355 = scalar_lea.vmem [#allocation10], %s354
        %s356 = smul.u32 16, %s32
        %s357 = smul.u32 16, %s32
        %s358 = smul.u32 16, %s32
        %v360 = vld [vmem:[%s289] sm:$0xff]
        %v361 = vld [vmem:[%s289 + $0x8] sm:$0xff]
        %v362 = vld [vmem:[%s289 + $0x10] sm:$0xff]
        %v363 = vld [vmem:[%s289 + $0x18] sm:$0xff]
        %v364 = vld [vmem:[%s289 + $0x20] sm:$0xff]
        %v365 = vld [vmem:[%s289 + $0x28] sm:$0xff]
        %v366 = vld [vmem:[%s289 + $0x30] sm:$0xff]
        %v367 = vld [vmem:[%s289 + $0x38] sm:$0xff]
        %v368 = vld [vmem:[%s289 + $0x40] sm:$0xff]
        %v369 = vld [vmem:[%s289 + $0x48] sm:$0xff]
        %v370 = vld [vmem:[%s289 + $0x50] sm:$0xff]
        %v371 = vld [vmem:[%s289 + $0x58] sm:$0xff]
        %v372 = vld [vmem:[%s289 + $0x60] sm:$0xff]
        %v373 = vld [vmem:[%s289 + $0x68] sm:$0xff]
        %v374 = vld [vmem:[%s289 + $0x70] sm:$0xff]
        %v375 = vld [vmem:[%s289 + $0x78] sm:$0xff]
        %v376 = vmul.f32 %v360, 0.9433962
        %v377 = vmul.f32 %v361, 0.9433962
        %v378 = vmul.f32 %v362, 0.9433962
        %v379 = vmul.f32 %v363, 0.9433962
        %v380 = vmul.f32 %v364, 0.9433962
        %v381 = vmul.f32 %v365, 0.9433962
        %v382 = vmul.f32 %v366, 0.9433962
        %v383 = vmul.f32 %v367, 0.9433962
        %v384 = vmul.f32 %v368, 0.9433962
        %v385 = vmul.f32 %v369, 0.9433962
        %v386 = vmul.f32 %v370, 0.9433962
        %v387 = vmul.f32 %v371, 0.9433962
        %v388 = vmul.f32 %v372, 0.9433962
        %v389 = vmul.f32 %v373, 0.9433962
        %v390 = vmul.f32 %v374, 0.9433962
        %v391 = vmul.f32 %v375, 0.9433962
        %v392 = vpack.c.bf16 %v377, %v376
        %v393 = vpack.c.bf16 %v379, %v378
        %v394 = vpack.c.bf16 %v381, %v380
        %v395 = vpack.c.bf16 %v383, %v382
        %v396 = vpack.c.bf16 %v385, %v384
        %v397 = vpack.c.bf16 %v387, %v386
        %v398 = vpack.c.bf16 %v389, %v388
        %v399 = vpack.c.bf16 %v391, %v390
        %v400 = vld [vmem:[%s298] sm:$0xff]
        %v401 = vld [vmem:[%s298 + $0x8] sm:$0xff]
        %v402 = vld [vmem:[%s298 + $0x10] sm:$0xff]
        %v403 = vld [vmem:[%s298 + $0x18] sm:$0xff]
        %v404 = vld [vmem:[%s298 + $0x20] sm:$0xff]
        %v405 = vld [vmem:[%s298 + $0x28] sm:$0xff]
        %v406 = vld [vmem:[%s298 + $0x30] sm:$0xff]
        %v407 = vld [vmem:[%s298 + $0x38] sm:$0xff]
        %v408 = vld [vmem:[%s298 + $0x40] sm:$0xff]
        %v409 = vld [vmem:[%s298 + $0x48] sm:$0xff]
        %v410 = vld [vmem:[%s298 + $0x50] sm:$0xff]
        %v411 = vld [vmem:[%s298 + $0x58] sm:$0xff]
        %v412 = vld [vmem:[%s298 + $0x60] sm:$0xff]
        %v413 = vld [vmem:[%s298 + $0x68] sm:$0xff]
        %v414 = vld [vmem:[%s298 + $0x70] sm:$0xff]
        %v415 = vld [vmem:[%s298 + $0x78] sm:$0xff]
        %v416 = vld [vmem:[%s298 + $0x80] sm:$0xff]
        %v417 = vld [vmem:[%s298 + $0x88] sm:$0xff]
        %v418 = vld [vmem:[%s298 + $0x90] sm:$0xff]
        %v419 = vld [vmem:[%s298 + $0x98] sm:$0xff]
        %v420 = vld [vmem:[%s298 + $0xa0] sm:$0xff]
        %v421 = vld [vmem:[%s298 + $0xa8] sm:$0xff]
        %v422 = vld [vmem:[%s298 + $0xb0] sm:$0xff]
        %v423 = vld [vmem:[%s298 + $0xb8] sm:$0xff]
        %v424 = vld [vmem:[%s298 + $0xc0] sm:$0xff]
        %v425 = vld [vmem:[%s298 + $0xc8] sm:$0xff]
        %v426 = vld [vmem:[%s298 + $0xd0] sm:$0xff]
        %v427 = vld [vmem:[%s298 + $0xd8] sm:$0xff]
        %v428 = vld [vmem:[%s298 + $0xe0] sm:$0xff]
        %v429 = vld [vmem:[%s298 + $0xe8] sm:$0xff]
        %v430 = vld [vmem:[%s298 + $0xf0] sm:$0xff]
        %v431 = vld [vmem:[%s298 + $0xf8] sm:$0xff]
        %v432 = vpack.c.bf16 %v401, %v400
        %v433 = vpack.c.bf16 %v403, %v402
        %v434 = vpack.c.bf16 %v405, %v404
        %v435 = vpack.c.bf16 %v407, %v406
        %v436 = vpack.c.bf16 %v409, %v408
        %v437 = vpack.c.bf16 %v411, %v410
        %v438 = vpack.c.bf16 %v413, %v412
        %v439 = vpack.c.bf16 %v415, %v414
        %v440 = vpack.c.bf16 %v417, %v416
        %v441 = vpack.c.bf16 %v419, %v418
        %v442 = vpack.c.bf16 %v421, %v420
        %v443 = vpack.c.bf16 %v423, %v422
        %v444 = vpack.c.bf16 %v425, %v424
        %v445 = vpack.c.bf16 %v427, %v426
        %v446 = vpack.c.bf16 %v429, %v428
        %v447 = vpack.c.bf16 %v431, %v430
        %v448 = vld [vmem:[%s307] sm:$0xff]
        %v449 = vld [vmem:[%s307 + $0x8] sm:$0xff]
        %v450 = vld [vmem:[%s307 + $0x10] sm:$0xff]
        %v451 = vld [vmem:[%s307 + $0x18] sm:$0xff]
        %v452 = vld [vmem:[%s307 + $0x20] sm:$0xff]
        %v453 = vld [vmem:[%s307 + $0x28] sm:$0xff]
        %v454 = vld [vmem:[%s307 + $0x30] sm:$0xff]
        %v455 = vld [vmem:[%s307 + $0x38] sm:$0xff]
        %v456 = vld [vmem:[%s307 + $0x40] sm:$0xff]
        %v457 = vld [vmem:[%s307 + $0x48] sm:$0xff]
        %v458 = vld [vmem:[%s307 + $0x50] sm:$0xff]
        %v459 = vld [vmem:[%s307 + $0x58] sm:$0xff]
        %v460 = vld [vmem:[%s307 + $0x60] sm:$0xff]
        %v461 = vld [vmem:[%s307 + $0x68] sm:$0xff]
        %v462 = vld [vmem:[%s307 + $0x70] sm:$0xff]
        %v463 = vld [vmem:[%s307 + $0x78] sm:$0xff]
        %v464 = vld [vmem:[%s307 + $0x80] sm:$0xff]
        %v465 = vld [vmem:[%s307 + $0x88] sm:$0xff]
        %v466 = vld [vmem:[%s307 + $0x90] sm:$0xff]
        %v467 = vld [vmem:[%s307 + $0x98] sm:$0xff]
        %v468 = vld [vmem:[%s307 + $0xa0] sm:$0xff]
        %v469 = vld [vmem:[%s307 + $0xa8] sm:$0xff]
        %v470 = vld [vmem:[%s307 + $0xb0] sm:$0xff]
        %v471 = vld [vmem:[%s307 + $0xb8] sm:$0xff]
        %v472 = vld [vmem:[%s307 + $0xc0] sm:$0xff]
        %v473 = vld [vmem:[%s307 + $0xc8] sm:$0xff]
        %v474 = vld [vmem:[%s307 + $0xd0] sm:$0xff]
        %v475 = vld [vmem:[%s307 + $0xd8] sm:$0xff]
        %v476 = vld [vmem:[%s307 + $0xe0] sm:$0xff]
        %v477 = vld [vmem:[%s307 + $0xe8] sm:$0xff]
        %v478 = vld [vmem:[%s307 + $0xf0] sm:$0xff]
        %v479 = vld [vmem:[%s307 + $0xf8] sm:$0xff]
        %v480 = vpack.c.bf16 %v449, %v448
        %v481 = vpack.c.bf16 %v451, %v450
        %v482 = vpack.c.bf16 %v453, %v452
        %v483 = vpack.c.bf16 %v455, %v454
        %v484 = vpack.c.bf16 %v457, %v456
        %v485 = vpack.c.bf16 %v459, %v458
        %v486 = vpack.c.bf16 %v461, %v460
        %v487 = vpack.c.bf16 %v463, %v462
        %v488 = vpack.c.bf16 %v465, %v464
        %v489 = vpack.c.bf16 %v467, %v466
        %v490 = vpack.c.bf16 %v469, %v468
        %v491 = vpack.c.bf16 %v471, %v470
        %v492 = vpack.c.bf16 %v473, %v472
        %v493 = vpack.c.bf16 %v475, %v474
        %v494 = vpack.c.bf16 %v477, %v476
        %v495 = vpack.c.bf16 %v479, %v478
        %496 = vmatprep.subr.bf16.mxu0 0
        %497 = vmatpush1.bf16.xpose.msra.mxu0 %v439
        %498 = vmatprep.subr.bf16.mxu0 0
        %499 = vmatpush1.bf16.xpose.msra.mxu0 %v438
        %500 = vmatprep.subr.bf16.mxu0 0
        %501 = vmatpush1.bf16.xpose.msra.mxu0 %v437
        %502 = vmatprep.subr.bf16.mxu0 0
        %503 = vmatpush1.bf16.xpose.msra.mxu0 %v436
        %504 = vmatprep.subr.bf16.mxu0 0
        %505 = vmatpush1.bf16.xpose.msra.mxu0 %v435
        %506 = vmatprep.subr.bf16.mxu0 0
        %507 = vmatpush1.bf16.xpose.msra.mxu0 %v434
        %508 = vmatprep.subr.bf16.mxu0 0
        %509 = vmatpush1.bf16.xpose.msra.mxu0 %v433
        %510 = vmatprep.subr.bf16.mxu0 0
        %511 = vmatpush1.bf16.xpose.msra.mxu0 %v432
        %512 = vmatprep.subr.bf16.mxu0 0
        %513 = vmatpush2.bf16.xpose.msra.mxu0 %v447
        %514 = vmatprep.subr.bf16.mxu0 0
        %515 = vmatpush2.bf16.xpose.msra.mxu0 %v446
        %516 = vmatprep.subr.bf16.mxu0 0
        %517 = vmatpush2.bf16.xpose.msra.mxu0 %v445
        %518 = vmatprep.subr.bf16.mxu0 0
        %519 = vmatpush2.bf16.xpose.msra.mxu0 %v444
        %520 = vmatprep.subr.bf16.mxu0 0
        %521 = vmatpush2.bf16.xpose.msra.mxu0 %v443
        %522 = vmatprep.subr.bf16.mxu0 0
        %523 = vmatpush2.bf16.xpose.msra.mxu0 %v442
        %524 = vmatprep.subr.bf16.mxu0 0
        %525 = vmatpush2.bf16.xpose.msra.mxu0 %v441
        %526 = vmatprep.subr.bf16.mxu0 0
        %527 = vmatpush2.bf16.xpose.msra.mxu0 %v440
        %528 = vmatprep.mubr.bf16.mxu0 0
        %529 = vmatmul.mubr.bf16.gmra.mxu0 %v392
        %v530 = vpop.f32.mrf.mxu0
        %v531 = vadd.f32 0.0, %v530
        %v532 = vpop.f32.mrf.mxu0
        %v533 = vadd.f32 0.0, %v532
        %v534 = vpop.f32.mrf.mxu0
        %v535 = vadd.f32 0.0, %v534
        %v536 = vpop.f32.mrf.mxu0
        %v537 = vadd.f32 0.0, %v536
        %538 = vmatprep.mubr.bf16.mxu0 0
        %539 = vmatmul.mubr.bf16.gmra.mxu0 %v393
        %v540 = vpop.f32.mrf.mxu0
        %v541 = vadd.f32 0.0, %v540
        %v542 = vpop.f32.mrf.mxu0
        %v543 = vadd.f32 0.0, %v542
        %v544 = vpop.f32.mrf.mxu0
        %v545 = vadd.f32 0.0, %v544
        %v546 = vpop.f32.mrf.mxu0
        %v547 = vadd.f32 0.0, %v546
        %548 = vmatprep.mubr.bf16.mxu0 0
        %549 = vmatmul.mubr.bf16.gmra.mxu0 %v394
        %v550 = vpop.f32.mrf.mxu0
        %v551 = vadd.f32 0.0, %v550
        %v552 = vpop.f32.mrf.mxu0
        %v553 = vadd.f32 0.0, %v552
        %v554 = vpop.f32.mrf.mxu0
        %v555 = vadd.f32 0.0, %v554
        %v556 = vpop.f32.mrf.mxu0
        %v557 = vadd.f32 0.0, %v556
        %558 = vmatprep.mubr.bf16.mxu0 0
        %559 = vmatmul.mubr.bf16.gmra.mxu0 %v395
        %v560 = vpop.f32.mrf.mxu0
        %v561 = vadd.f32 0.0, %v560
        %v562 = vpop.f32.mrf.mxu0
        %v563 = vadd.f32 0.0, %v562
        %v564 = vpop.f32.mrf.mxu0
        %v565 = vadd.f32 0.0, %v564
        %v566 = vpop.f32.mrf.mxu0
        %v567 = vadd.f32 0.0, %v566
        %568 = vmatprep.mubr.bf16.mxu0 0
        %569 = vmatmul.mubr.bf16.gmra.mxu0 %v396
        %v570 = vpop.f32.mrf.mxu0
        %v571 = vadd.f32 0.0, %v570
        %v572 = vpop.f32.mrf.mxu0
        %v573 = vadd.f32 0.0, %v572
        %v574 = vpop.f32.mrf.mxu0
        %v575 = vadd.f32 0.0, %v574
        %v576 = vpop.f32.mrf.mxu0
        %v577 = vadd.f32 0.0, %v576
        %578 = vmatprep.mubr.bf16.mxu0 0
        %579 = vmatmul.mubr.bf16.gmra.mxu0 %v397
        %v580 = vpop.f32.mrf.mxu0
        %v581 = vadd.f32 0.0, %v580
        %v582 = vpop.f32.mrf.mxu0
        %v583 = vadd.f32 0.0, %v582
        %v584 = vpop.f32.mrf.mxu0
        %v585 = vadd.f32 0.0, %v584
        %v586 = vpop.f32.mrf.mxu0
        %v587 = vadd.f32 0.0, %v586
        %588 = vmatprep.mubr.bf16.mxu0 0
        %589 = vmatmul.mubr.bf16.gmra.mxu0 %v398
        %v590 = vpop.f32.mrf.mxu0
        %v591 = vadd.f32 0.0, %v590
        %v592 = vpop.f32.mrf.mxu0
        %v593 = vadd.f32 0.0, %v592
        %v594 = vpop.f32.mrf.mxu0
        %v595 = vadd.f32 0.0, %v594
        %v596 = vpop.f32.mrf.mxu0
        %v597 = vadd.f32 0.0, %v596
        %598 = vmatprep.mubr.bf16.mxu0 0
        %599 = vmatmul.mubr.bf16.gmra.mxu0 %v399
        %v600 = vpop.f32.mrf.mxu0
        %v601 = vadd.f32 0.0, %v600
        %v602 = vpop.f32.mrf.mxu0
        %v603 = vadd.f32 0.0, %v602
        %v604 = vpop.f32.mrf.mxu0
        %v605 = vadd.f32 0.0, %v604
        %v606 = vpop.f32.mrf.mxu0
        %v607 = vadd.f32 0.0, %v606
        %608 = vdwg.mxu0
        %v609 = vmax.f32 %v531, %v533
        %610 = vmax.xlane.f32.xlu0 %v609
        %v611 = vpop.xlane.xlu0 %610
        %v612 = vmax.f32 %v535, %v537
        %613 = vmax.xlane.f32.xlu0 %v612
        %v614 = vpop.xlane.xlu0 %613
        %v615 = vmax.f32 %v541, %v543
        %616 = vmax.xlane.f32.xlu0 %v615
        %v617 = vpop.xlane.xlu0 %616
        %v618 = vmax.f32 %v545, %v547
        %619 = vmax.xlane.f32.xlu0 %v618
        %v620 = vpop.xlane.xlu0 %619
        %v621 = vmax.f32 %v551, %v553
        %622 = vmax.xlane.f32.xlu0 %v621
        %v623 = vpop.xlane.xlu0 %622
        %v624 = vmax.f32 %v555, %v557
        %625 = vmax.xlane.f32.xlu0 %v624
        %v626 = vpop.xlane.xlu0 %625
        %v627 = vmax.f32 %v561, %v563
        %628 = vmax.xlane.f32.xlu0 %v627
        %v629 = vpop.xlane.xlu0 %628
        %v630 = vmax.f32 %v565, %v567
        %631 = vmax.xlane.f32.xlu0 %v630
        %v632 = vpop.xlane.xlu0 %631
        %v633 = vmax.f32 %v571, %v573
        %634 = vmax.xlane.f32.xlu0 %v633
        %v635 = vpop.xlane.xlu0 %634
        %v636 = vmax.f32 %v575, %v577
        %637 = vmax.xlane.f32.xlu0 %v636
        %v638 = vpop.xlane.xlu0 %637
        %v639 = vmax.f32 %v581, %v583
        %640 = vmax.xlane.f32.xlu0 %v639
        %v641 = vpop.xlane.xlu0 %640
        %v642 = vmax.f32 %v585, %v587
        %643 = vmax.xlane.f32.xlu0 %v642
        %v644 = vpop.xlane.xlu0 %643
        %v645 = vmax.f32 %v591, %v593
        %646 = vmax.xlane.f32.xlu0 %v645
        %v647 = vpop.xlane.xlu0 %646
        %v648 = vmax.f32 %v595, %v597
        %649 = vmax.xlane.f32.xlu0 %v648
        %v650 = vpop.xlane.xlu0 %649
        %v651 = vmax.f32 %v601, %v603
        %652 = vmax.xlane.f32.xlu0 %v651
        %v653 = vpop.xlane.xlu0 %652
        %v654 = vmax.f32 %v605, %v607
        %655 = vmax.xlane.f32.xlu0 %v654
        %v656 = vpop.xlane.xlu0 %655
        %v657 = vsub.f32 %v531, %v611
        %v658 = vsub.f32 %v533, %v611
        %v659 = vsub.f32 %v535, %v614
        %v660 = vsub.f32 %v537, %v614
        %v661 = vsub.f32 %v541, %v617
        %v662 = vsub.f32 %v543, %v617
        %v663 = vsub.f32 %v545, %v620
        %v664 = vsub.f32 %v547, %v620
        %v665 = vsub.f32 %v551, %v623
        %v666 = vsub.f32 %v553, %v623
        %v667 = vsub.f32 %v555, %v626
        %v668 = vsub.f32 %v557, %v626
        %v669 = vsub.f32 %v561, %v629
        %v670 = vsub.f32 %v563, %v629
        %v671 = vsub.f32 %v565, %v632
        %v672 = vsub.f32 %v567, %v632
        %v673 = vsub.f32 %v571, %v635
        %v674 = vsub.f32 %v573, %v635
        %v675 = vsub.f32 %v575, %v638
        %v676 = vsub.f32 %v577, %v638
        %v677 = vsub.f32 %v581, %v641
        %v678 = vsub.f32 %v583, %v641
        %v679 = vsub.f32 %v585, %v644
        %v680 = vsub.f32 %v587, %v644
        %v681 = vsub.f32 %v591, %v647
        %v682 = vsub.f32 %v593, %v647
        %v683 = vsub.f32 %v595, %v650
        %v684 = vsub.f32 %v597, %v650
        %v685 = vsub.f32 %v601, %v653
        %v686 = vsub.f32 %v603, %v653
        %v687 = vsub.f32 %v605, %v656
        %v688 = vsub.f32 %v607, %v656
        %v689 = vmul.f32 %v657, 1.442695
        %v690 = vpow.pop %v689
        %v691 = vmul.f32 %v658, 1.442695
        %v692 = vpow.pop %v691
        %v693 = vmul.f32 %v659, 1.442695
        %v694 = vpow.pop %v693
        %v695 = vmul.f32 %v660, 1.442695
        %v696 = vpow.pop %v695
        %v697 = vmul.f32 %v661, 1.442695
        %v698 = vpow.pop %v697
        %v699 = vmul.f32 %v662, 1.442695
        %v700 = vpow.pop %v699
        %v701 = vmul.f32 %v663, 1.442695
        %v702 = vpow.pop %v701
        %v703 = vmul.f32 %v664, 1.442695
        %v704 = vpow.pop %v703
        %v705 = vmul.f32 %v665, 1.442695
        %v706 = vpow.pop %v705
        %v707 = vmul.f32 %v666, 1.442695
        %v708 = vpow.pop %v707
        %v709 = vmul.f32 %v667, 1.442695
        %v710 = vpow.pop %v709
        %v711 = vmul.f32 %v668, 1.442695
        %v712 = vpow.pop %v711
        %v713 = vmul.f32 %v669, 1.442695
        %v714 = vpow.pop %v713
        %v715 = vmul.f32 %v670, 1.442695
        %v716 = vpow.pop %v715
        %v717 = vmul.f32 %v671, 1.442695
        %v718 = vpow.pop %v717
        %v719 = vmul.f32 %v672, 1.442695
        %v720 = vpow.pop %v719
        %v721 = vmul.f32 %v673, 1.442695
        %v722 = vpow.pop %v721
        %v723 = vmul.f32 %v674, 1.442695
        %v724 = vpow.pop %v723
        %v725 = vmul.f32 %v675, 1.442695
        %v726 = vpow.pop %v725
        %v727 = vmul.f32 %v676, 1.442695
        %v728 = vpow.pop %v727
        %v729 = vmul.f32 %v677, 1.442695
        %v730 = vpow.pop %v729
        %v731 = vmul.f32 %v678, 1.442695
        %v732 = vpow.pop %v731
        %v733 = vmul.f32 %v679, 1.442695
        %v734 = vpow.pop %v733
        %v735 = vmul.f32 %v680, 1.442695
        %v736 = vpow.pop %v735
        %v737 = vmul.f32 %v681, 1.442695
        %v738 = vpow.pop %v737
        %v739 = vmul.f32 %v682, 1.442695
        %v740 = vpow.pop %v739
        %v741 = vmul.f32 %v683, 1.442695
        %v742 = vpow.pop %v741
        %v743 = vmul.f32 %v684, 1.442695
        %v744 = vpow.pop %v743
        %v745 = vmul.f32 %v685, 1.442695
        %v746 = vpow.pop %v745
        %v747 = vmul.f32 %v686, 1.442695
        %v748 = vpow.pop %v747
        %v749 = vmul.f32 %v687, 1.442695
        %v750 = vpow.pop %v749
        %v751 = vmul.f32 %v688, 1.442695
        %v752 = vpow.pop %v751
        %v753 = vadd.f32 %v690, %v692
        %754 = vadd.xlane.f32.xlu0 %v753
        %v755 = vpop.xlane.xlu0 %754
        %v756 = vadd.f32 %v694, %v696
        %757 = vadd.xlane.f32.xlu0 %v756
        %v758 = vpop.xlane.xlu0 %757
        %v759 = vadd.f32 %v698, %v700
        %760 = vadd.xlane.f32.xlu0 %v759
        %v761 = vpop.xlane.xlu0 %760
        %v762 = vadd.f32 %v702, %v704
        %763 = vadd.xlane.f32.xlu0 %v762
        %v764 = vpop.xlane.xlu0 %763
        %v765 = vadd.f32 %v706, %v708
        %766 = vadd.xlane.f32.xlu0 %v765
        %v767 = vpop.xlane.xlu0 %766
        %v768 = vadd.f32 %v710, %v712
        %769 = vadd.xlane.f32.xlu0 %v768
        %v770 = vpop.xlane.xlu0 %769
        %v771 = vadd.f32 %v714, %v716
        %772 = vadd.xlane.f32.xlu0 %v771
        %v773 = vpop.xlane.xlu0 %772
        %v774 = vadd.f32 %v718, %v720
        %775 = vadd.xlane.f32.xlu0 %v774
        %v776 = vpop.xlane.xlu0 %775
        %v777 = vadd.f32 %v722, %v724
        %778 = vadd.xlane.f32.xlu0 %v777
        %v779 = vpop.xlane.xlu0 %778
        %v780 = vadd.f32 %v726, %v728
        %781 = vadd.xlane.f32.xlu0 %v780
        %v782 = vpop.xlane.xlu0 %781
        %v783 = vadd.f32 %v730, %v732
        %784 = vadd.xlane.f32.xlu0 %v783
        %v785 = vpop.xlane.xlu0 %784
        %v786 = vadd.f32 %v734, %v736
        %787 = vadd.xlane.f32.xlu0 %v786
        %v788 = vpop.xlane.xlu0 %787
        %v789 = vadd.f32 %v738, %v740
        %790 = vadd.xlane.f32.xlu0 %v789
        %v791 = vpop.xlane.xlu0 %790
        %v792 = vadd.f32 %v742, %v744
        %793 = vadd.xlane.f32.xlu0 %v792
        %v794 = vpop.xlane.xlu0 %793
        %v795 = vadd.f32 %v746, %v748
        %796 = vadd.xlane.f32.xlu0 %v795
        %v797 = vpop.xlane.xlu0 %796
        %v798 = vadd.f32 %v750, %v752
        %799 = vadd.xlane.f32.xlu0 %v798
        %v800 = vpop.xlane.xlu0 %799
        %v801 = vrcp.pop %v755
        %v802 = vmul.f32 2.0, %v801
        %v803 = vrcp.pop %v758
        %v804 = vmul.f32 2.0, %v803
        %v805 = vrcp.pop %v761
        %v806 = vmul.f32 2.0, %v805
        %v807 = vrcp.pop %v764
        %v808 = vmul.f32 2.0, %v807
        %v809 = vrcp.pop %v767
        %v810 = vmul.f32 2.0, %v809
        %v811 = vrcp.pop %v770
        %v812 = vmul.f32 2.0, %v811
        %v813 = vrcp.pop %v773
        %v814 = vmul.f32 2.0, %v813
        %v815 = vrcp.pop %v776
        %v816 = vmul.f32 2.0, %v815
        %v817 = vrcp.pop %v779
        %v818 = vmul.f32 2.0, %v817
        %v819 = vrcp.pop %v782
        %v820 = vmul.f32 2.0, %v819
        %v821 = vrcp.pop %v785
        %v822 = vmul.f32 2.0, %v821
        %v823 = vrcp.pop %v788
        %v824 = vmul.f32 2.0, %v823
        %v825 = vrcp.pop %v791
        %v826 = vmul.f32 2.0, %v825
        %v827 = vrcp.pop %v794
        %v828 = vmul.f32 2.0, %v827
        %v829 = vrcp.pop %v797
        %v830 = vmul.f32 2.0, %v829
        %v831 = vrcp.pop %v800
        %v832 = vmul.f32 2.0, %v831
        %v833 = vld [vmem:[%s316] sm:$0xff]
        %v834 = vld [vmem:[%s316 + $0x8] sm:$0xff]
        %v835 = vld [vmem:[%s316 + $0x10] sm:$0xff]
        %v836 = vld [vmem:[%s316 + $0x18] sm:$0xff]
        %v837 = vld [vmem:[%s316 + $0x20] sm:$0xff]
        %v838 = vld [vmem:[%s316 + $0x28] sm:$0xff]
        %v839 = vld [vmem:[%s316 + $0x30] sm:$0xff]
        %v840 = vld [vmem:[%s316 + $0x38] sm:$0xff]
        %v841 = vld [vmem:[%s316 + $0x40] sm:$0xff]
        %v842 = vld [vmem:[%s316 + $0x48] sm:$0xff]
        %v843 = vld [vmem:[%s316 + $0x50] sm:$0xff]
        %v844 = vld [vmem:[%s316 + $0x58] sm:$0xff]
        %v845 = vld [vmem:[%s316 + $0x60] sm:$0xff]
        %v846 = vld [vmem:[%s316 + $0x68] sm:$0xff]
        %v847 = vld [vmem:[%s316 + $0x70] sm:$0xff]
        %v848 = vld [vmem:[%s316 + $0x78] sm:$0xff]
        %v849 = vld [vmem:[%s316 + $0x80] sm:$0xff]
        %v850 = vld [vmem:[%s316 + $0x88] sm:$0xff]
        %v851 = vld [vmem:[%s316 + $0x90] sm:$0xff]
        %v852 = vld [vmem:[%s316 + $0x98] sm:$0xff]
        %v853 = vld [vmem:[%s316 + $0xa0] sm:$0xff]
        %v854 = vld [vmem:[%s316 + $0xa8] sm:$0xff]
        %v855 = vld [vmem:[%s316 + $0xb0] sm:$0xff]
        %v856 = vld [vmem:[%s316 + $0xb8] sm:$0xff]
        %v857 = vld [vmem:[%s316 + $0xc0] sm:$0xff]
        %v858 = vld [vmem:[%s316 + $0xc8] sm:$0xff]
        %v859 = vld [vmem:[%s316 + $0xd0] sm:$0xff]
        %v860 = vld [vmem:[%s316 + $0xd8] sm:$0xff]
        %v861 = vld [vmem:[%s316 + $0xe0] sm:$0xff]
        %v862 = vld [vmem:[%s316 + $0xe8] sm:$0xff]
        %v863 = vld [vmem:[%s316 + $0xf0] sm:$0xff]
        %v864 = vld [vmem:[%s316 + $0xf8] sm:$0xff]
        %vm865 = vcmp.lt.s32.totalorder %v833, 0
        %vm866 = vcmp.lt.s32.totalorder %v834, 0
        %vm867 = vcmp.lt.s32.totalorder %v835, 0
        %vm868 = vcmp.lt.s32.totalorder %v836, 0
        %vm869 = vcmp.lt.s32.totalorder %v837, 0
        %vm870 = vcmp.lt.s32.totalorder %v838, 0
        %vm871 = vcmp.lt.s32.totalorder %v839, 0
        %vm872 = vcmp.lt.s32.totalorder %v840, 0
        %vm873 = vcmp.lt.s32.totalorder %v841, 0
        %vm874 = vcmp.lt.s32.totalorder %v842, 0
        %vm875 = vcmp.lt.s32.totalorder %v843, 0
        %vm876 = vcmp.lt.s32.totalorder %v844, 0
        %vm877 = vcmp.lt.s32.totalorder %v845, 0
        %vm878 = vcmp.lt.s32.totalorder %v846, 0
        %vm879 = vcmp.lt.s32.totalorder %v847, 0
        %vm880 = vcmp.lt.s32.totalorder %v848, 0
        %vm881 = vcmp.lt.s32.totalorder %v849, 0
        %vm882 = vcmp.lt.s32.totalorder %v850, 0
        %vm883 = vcmp.lt.s32.totalorder %v851, 0
        %vm884 = vcmp.lt.s32.totalorder %v852, 0
        %vm885 = vcmp.lt.s32.totalorder %v853, 0
        %vm886 = vcmp.lt.s32.totalorder %v854, 0
        %vm887 = vcmp.lt.s32.totalorder %v855, 0
        %vm888 = vcmp.lt.s32.totalorder %v856, 0
        %vm889 = vcmp.lt.s32.totalorder %v857, 0
        %vm890 = vcmp.lt.s32.totalorder %v858, 0
        %vm891 = vcmp.lt.s32.totalorder %v859, 0
        %vm892 = vcmp.lt.s32.totalorder %v860, 0
        %vm893 = vcmp.lt.s32.totalorder %v861, 0
        %vm894 = vcmp.lt.s32.totalorder %v862, 0
        %vm895 = vcmp.lt.s32.totalorder %v863, 0
        %vm896 = vcmp.lt.s32.totalorder %v864, 0
        %v897 = vmul.f32 %v690, %v802
        %v898 = vmul.f32 %v692, %v802
        %v899 = vmul.f32 %v694, %v804
        %v900 = vmul.f32 %v696, %v804
        %v901 = vmul.f32 %v698, %v806
        %v902 = vmul.f32 %v700, %v806
        %v903 = vmul.f32 %v702, %v808
        %v904 = vmul.f32 %v704, %v808
        %v905 = vmul.f32 %v706, %v810
        %v906 = vmul.f32 %v708, %v810
        %v907 = vmul.f32 %v710, %v812
        %v908 = vmul.f32 %v712, %v812
        %v909 = vmul.f32 %v714, %v814
        %v910 = vmul.f32 %v716, %v814
        %v911 = vmul.f32 %v718, %v816
        %v912 = vmul.f32 %v720, %v816
        %v913 = vmul.f32 %v722, %v818
        %v914 = vmul.f32 %v724, %v818
        %v915 = vmul.f32 %v726, %v820
        %v916 = vmul.f32 %v728, %v820
        %v917 = vmul.f32 %v730, %v822
        %v918 = vmul.f32 %v732, %v822
        %v919 = vmul.f32 %v734, %v824
        %v920 = vmul.f32 %v736, %v824
        %v921 = vmul.f32 %v738, %v826
        %v922 = vmul.f32 %v740, %v826
        %v923 = vmul.f32 %v742, %v828
        %v924 = vmul.f32 %v744, %v828
        %v925 = vmul.f32 %v746, %v830
        %v926 = vmul.f32 %v748, %v830
        %v927 = vmul.f32 %v750, %v832
        %v928 = vmul.f32 %v752, %v832
        %v929 = vsel %vm865, %v897, 0.0
        %v930 = vsel %vm866, %v898, 0.0
        %v931 = vsel %vm867, %v899, 0.0
        %v932 = vsel %vm868, %v900, 0.0
        %v933 = vsel %vm869, %v901, 0.0
        %v934 = vsel %vm870, %v902, 0.0
        %v935 = vsel %vm871, %v903, 0.0
        %v936 = vsel %vm872, %v904, 0.0
        %v937 = vsel %vm873, %v905, 0.0
        %v938 = vsel %vm874, %v906, 0.0
        %v939 = vsel %vm875, %v907, 0.0
        %v940 = vsel %vm876, %v908, 0.0
        %v941 = vsel %vm877, %v909, 0.0
        %v942 = vsel %vm878, %v910, 0.0
        %v943 = vsel %vm879, %v911, 0.0
        %v944 = vsel %vm880, %v912, 0.0
        %v945 = vsel %vm881, %v913, 0.0
        %v946 = vsel %vm882, %v914, 0.0
        %v947 = vsel %vm883, %v915, 0.0
        %v948 = vsel %vm884, %v916, 0.0
        %v949 = vsel %vm885, %v917, 0.0
        %v950 = vsel %vm886, %v918, 0.0
        %v951 = vsel %vm887, %v919, 0.0
        %v952 = vsel %vm888, %v920, 0.0
        %v953 = vsel %vm889, %v921, 0.0
        %v954 = vsel %vm890, %v922, 0.0
        %v955 = vsel %vm891, %v923, 0.0
        %v956 = vsel %vm892, %v924, 0.0
        %v957 = vsel %vm893, %v925, 0.0
        %v958 = vsel %vm894, %v926, 0.0
        %v959 = vsel %vm895, %v927, 0.0
        %v960 = vsel %vm896, %v928, 0.0
        %v961 = vpack.c.bf16 %v931, %v929
        %v962 = vpack.c.bf16 %v932, %v930
        %v963 = vpack.c.bf16 %v935, %v933
        %v964 = vpack.c.bf16 %v936, %v934
        %v965 = vpack.c.bf16 %v939, %v937
        %v966 = vpack.c.bf16 %v940, %v938
        %v967 = vpack.c.bf16 %v943, %v941
        %v968 = vpack.c.bf16 %v944, %v942
        %v969 = vpack.c.bf16 %v947, %v945
        %v970 = vpack.c.bf16 %v948, %v946
        %v971 = vpack.c.bf16 %v951, %v949
        %v972 = vpack.c.bf16 %v952, %v950
        %v973 = vpack.c.bf16 %v955, %v953
        %v974 = vpack.c.bf16 %v956, %v954
        %v975 = vpack.c.bf16 %v959, %v957
        %v976 = vpack.c.bf16 %v960, %v958
        %977 = vmatprep.subr.bf16.mxu0 0
        %978 = vmatpush1.bf16.msra.mxu0 %v487
        %979 = vmatprep.subr.bf16.mxu0 0
        %980 = vmatpush1.bf16.msra.mxu0 %v486
        %981 = vmatprep.subr.bf16.mxu0 0
        %982 = vmatpush1.bf16.msra.mxu0 %v485
        %983 = vmatprep.subr.bf16.mxu0 0
        %984 = vmatpush1.bf16.msra.mxu0 %v484
        %985 = vmatprep.subr.bf16.mxu0 0
        %986 = vmatpush1.bf16.msra.mxu0 %v483
        %987 = vmatprep.subr.bf16.mxu0 0
        %988 = vmatpush1.bf16.msra.mxu0 %v482
        %989 = vmatprep.subr.bf16.mxu0 0
        %990 = vmatpush1.bf16.msra.mxu0 %v481
        %991 = vmatprep.subr.bf16.mxu0 0
        %992 = vmatpush1.bf16.msra.mxu0 %v480
        %993 = vmatprep.subr.bf16.mxu0 0
        %994 = vmatpush2.bf16.msra.mxu0 %v495
        %995 = vmatprep.subr.bf16.mxu0 0
        %996 = vmatpush2.bf16.msra.mxu0 %v494
        %997 = vmatprep.subr.bf16.mxu0 0
        %998 = vmatpush2.bf16.msra.mxu0 %v493
        %999 = vmatprep.subr.bf16.mxu0 0
        %1000 = vmatpush2.bf16.msra.mxu0 %v492
        %1001 = vmatprep.subr.bf16.mxu0 0
        %1002 = vmatpush2.bf16.msra.mxu0 %v491
        %1003 = vmatprep.subr.bf16.mxu0 0
        %1004 = vmatpush2.bf16.msra.mxu0 %v490
        %1005 = vmatprep.subr.bf16.mxu0 0
        %1006 = vmatpush2.bf16.msra.mxu0 %v489
        %1007 = vmatprep.subr.bf16.mxu0 0
        %1008 = vmatpush2.bf16.msra.mxu0 %v488
        %1009 = vmatprep.mubr.bf16.mxu0 %v962
        %1010 = vmatmul.mubr.bf16.gmra.mxu0 %v961
        %v1011 = vpop.f32.mrf.mxu0
        %v1012 = vadd.f32 0.0, %v1011
        %v1013 = vpop.f32.mrf.mxu0
        %v1014 = vpop.f32.mrf.mxu0
        %v1015 = vadd.f32 0.0, %v1014
        %v1016 = vpop.f32.mrf.mxu0
        %1017 = vmatprep.mubr.bf16.mxu0 %v964
        %1018 = vmatmul.mubr.bf16.gmra.mxu0 %v963
        %v1019 = vpop.f32.mrf.mxu0
        %v1020 = vadd.f32 0.0, %v1019
        %v1021 = vpop.f32.mrf.mxu0
        %v1022 = vpop.f32.mrf.mxu0
        %v1023 = vadd.f32 0.0, %v1022
        %v1024 = vpop.f32.mrf.mxu0
        %1025 = vmatprep.mubr.bf16.mxu0 %v966
        %1026 = vmatmul.mubr.bf16.gmra.mxu0 %v965
        %v1027 = vpop.f32.mrf.mxu0
        %v1028 = vadd.f32 0.0, %v1027
        %v1029 = vpop.f32.mrf.mxu0
        %v1030 = vpop.f32.mrf.mxu0
        %v1031 = vadd.f32 0.0, %v1030
        %v1032 = vpop.f32.mrf.mxu0
        %1033 = vmatprep.mubr.bf16.mxu0 %v968
        %1034 = vmatmul.mubr.bf16.gmra.mxu0 %v967
        %v1035 = vpop.f32.mrf.mxu0
        %v1036 = vadd.f32 0.0, %v1035
        %v1037 = vpop.f32.mrf.mxu0
        %v1038 = vpop.f32.mrf.mxu0
        %v1039 = vadd.f32 0.0, %v1038
        %v1040 = vpop.f32.mrf.mxu0
        %1041 = vmatprep.mubr.bf16.mxu0 %v970
        %1042 = vmatmul.mubr.bf16.gmra.mxu0 %v969
        %v1043 = vpop.f32.mrf.mxu0
        %v1044 = vadd.f32 0.0, %v1043
        %v1045 = vpop.f32.mrf.mxu0
        %v1046 = vpop.f32.mrf.mxu0
        %v1047 = vadd.f32 0.0, %v1046
        %v1048 = vpop.f32.mrf.mxu0
        %1049 = vmatprep.mubr.bf16.mxu0 %v972
        %1050 = vmatmul.mubr.bf16.gmra.mxu0 %v971
        %v1051 = vpop.f32.mrf.mxu0
        %v1052 = vadd.f32 0.0, %v1051
        %v1053 = vpop.f32.mrf.mxu0
        %v1054 = vpop.f32.mrf.mxu0
        %v1055 = vadd.f32 0.0, %v1054
        %v1056 = vpop.f32.mrf.mxu0
        %1057 = vmatprep.mubr.bf16.mxu0 %v974
        %1058 = vmatmul.mubr.bf16.gmra.mxu0 %v973
        %v1059 = vpop.f32.mrf.mxu0
        %v1060 = vadd.f32 0.0, %v1059
        %v1061 = vpop.f32.mrf.mxu0
        %v1062 = vpop.f32.mrf.mxu0
        %v1063 = vadd.f32 0.0, %v1062
        %v1064 = vpop.f32.mrf.mxu0
        %1065 = vmatprep.mubr.bf16.mxu0 %v976
        %1066 = vmatmul.mubr.bf16.gmra.mxu0 %v975
        %v1067 = vpop.f32.mrf.mxu0
        %v1068 = vadd.f32 0.0, %v1067
        %v1069 = vpop.f32.mrf.mxu0
        %v1070 = vpop.f32.mrf.mxu0
        %v1071 = vadd.f32 0.0, %v1070
        %v1072 = vpop.f32.mrf.mxu0
        %1073 = vdwg.mxu0
        %1074 = vst [vmem:[%s355] sm:$0xff] %v1012
        %1075 = vst [vmem:[%s355 + $0x8] sm:$0xff] %v1015
        %1076 = vst [vmem:[%s355 + $0x10] sm:$0xff] %v1020
        %1077 = vst [vmem:[%s355 + $0x18] sm:$0xff] %v1023
        %1078 = vst [vmem:[%s355 + $0x20] sm:$0xff] %v1028
        %1079 = vst [vmem:[%s355 + $0x28] sm:$0xff] %v1031
        %1080 = vst [vmem:[%s355 + $0x30] sm:$0xff] %v1036
        %1081 = vst [vmem:[%s355 + $0x38] sm:$0xff] %v1039
        %1082 = vst [vmem:[%s355 + $0x40] sm:$0xff] %v1044
        %1083 = vst [vmem:[%s355 + $0x48] sm:$0xff] %v1047
        %1084 = vst [vmem:[%s355 + $0x50] sm:$0xff] %v1052
        %1085 = vst [vmem:[%s355 + $0x58] sm:$0xff] %v1055
        %1086 = vst [vmem:[%s355 + $0x60] sm:$0xff] %v1060
        %1087 = vst [vmem:[%s355 + $0x68] sm:$0xff] %v1063
        %1088 = vst [vmem:[%s355 + $0x70] sm:$0xff] %v1068
        %1089 = vst [vmem:[%s355 + $0x78] sm:$0xff] %v1071
        %s1090 = sand.u32 %s157, 1
        %s1091 = scalar_lea.sflag [#allocation4], %s1090
        %s1092 = sand.u32 %s157, 1
        %s1093 = smul.addr %s1092, 128
        %s1094 = scalar_lea.vmem [#allocation10], %s1093
        // Predicated region
        $region53: #{tpu_custom_call.1} parent=35 // pred_check
          %p1095 = pneg %p167
        $region54: #{tpu_custom_call.1} parent=35 // pred_check_branch
          %1097 = sbr.rel (%p1095) target = $region56
        $region55: #{tpu_custom_call.1} parent=35 // pred_region
          %s1098 = smul.u32 16, %s32
          %s1100 = ssub.s32 2048, 2048
          %1101 = vsyncadd %s1091, %s1100
          %s1102 = smul.addr %s31, 32
          %s1103 = sadd.s32 %s1098, %s1102
          %s1104 = smul.addr %s1103, 128
          %s1105 = scalar_lea.hbm %s4, %s1104
          %s1106 = sshll.u32 %s1094, 4
          %s1107 = int_to_ptr.vmem [resolvable:$true] %s1106
          %1112 = dma.vmem_to_hbm [thread:$0]  %s1107, 2048, %s1105, %s1091, 128, 128, 8
        $region56: #{tpu_custom_call.1} parent=35 // pred_fallthru
          _
      $region36: #{tpu_custom_call.1} parent=5 // pred_fallthru
        _
      %p1113 = scmp.le.s32.totalorder 2, %s22
      // Predicated region
      $region57: #{tpu_custom_call.1} parent=5 // pred_check
        %p1114 = pneg %p1113
      $region58: #{tpu_custom_call.1} parent=5 // pred_check_branch
        %1116 = sbr.rel (%p1114) target = $region60
      $region59: #{tpu_custom_call.1} parent=5 // pred_region
        %s1117 = ssub.s32 %s22, 2
        // Predicated region
        $region61: #{tpu_custom_call.1} parent=59 // pred_check
          %p1118 = pneg %p173
        $region62: #{tpu_custom_call.1} parent=59 // pred_check_branch
          %1120 = sbr.rel (%p1118) target = $region64
        $region63: #{tpu_custom_call.1} parent=59 // pred_region
          %s1121 = sand.u32 %s158, 1
          %s1122 = scalar_lea.sflag [#allocation4], %s1121
          %s1123 = sand.u32 %s158, 1
          %s1124 = smul.addr %s1123, 128
          %s1125 = scalar_lea.vmem [#allocation10], %s1124
          %1126 = dma.done %s1122, 2048
        $region64: #{tpu_custom_call.1} parent=59 // pred_fallthru
          _
      $region60: #{tpu_custom_call.1} parent=5 // pred_fallthru
        _
    $region6: #{tpu_custom_call.1} parent=1 // loop_footer
      %s26 = sadd.s32 1, %s22
    $region7: #{tpu_custom_call.1} parent=1 // loop_footer_branch
      %21 = sbr.rel target = $region3
    $region8: #{tpu_custom_call.1} parent=1 // loop_exit
      _
    %1127 = vsyncpa [#allocation3], 1
    %s1128 = scalar_lea.sflag [#allocation3], 1
    %1129 = vsyncpa %s1128, 1
    %1130 = vsyncpa [#allocation6], 1
    %s1131 = scalar_lea.sflag [#allocation6], 1
    %1132 = vsyncpa %s1131, 1
    %1133 = vsyncpa [#allocation9], 1
    %s1134 = scalar_lea.sflag [#allocation9], 1
    %1135 = vsyncpa %s1134, 1
    %1136 = vsyncpa [#allocation4], 1
    %s1137 = scalar_lea.sflag [#allocation4], 1
    %1138 = vsyncpa %s1137, 1

</llo_original>
